<compile_context>
chip_gen: v6e
topology: v6e:2x2x1
jax: 0.10.0
libtpu: 0.0.40
codegen_flags: <defaults>
</compile_context>

<pallas_src>
import functools

import jax
import jax.numpy as jnp
from jax.experimental import pallas as pl
from jax.experimental.pallas import tpu as pltpu

ALPHA = 1.0
GAMMA = 2            # applied as an explicit square in-kernel (avoids pow -> exp/log)
IGNORE_INDEX = -100


def focal_loss_kernel(logits_ref, targets_ref, partial_ref, *, n_rows, tile_n):
    # logits_ref: (TILE_N, C) in native dtype (f32 / bf16); softmax math stays in f32.
    x = logits_ref[...].astype(jnp.float32)
    tgt = targets_ref[...]                                    # (TILE_N, 1) int32

    # Numerically-stable log-sum-exp (VPU adds, XLU reductions, EUP exp/log).
    m = jnp.max(x, axis=-1, keepdims=True)                    # (TILE_N, 1)
    lse = jnp.log(jnp.sum(jnp.exp(x - m), axis=-1, keepdims=True)) + m

    # Target-class logit via a (1, C) column iota broadcast against (TILE_N, 1) targets.
    # (No (TILE_N, C) int32 iota / f32 one-hot materialization.)
    col = jax.lax.broadcasted_iota(jnp.int32, (1, x.shape[-1]), 1)
    tgt_logit = jnp.sum(jnp.where(col == tgt, x, 0.0), axis=-1, keepdims=True)

    # Row validity: within the real N (the ragged last tile reads garbage rows) AND not
    # ignore_index.  Applied after the per-row math so NaN/Inf from garbage rows is dropped.
    row = pl.program_id(0) * tile_n + jax.lax.broadcasted_iota(jnp.int32, (tile_n, 1), 0)
    valid = jnp.logical_and(row < n_rows, tgt != IGNORE_INDEX)
    ce = jnp.where(valid, lse - tgt_logit, 0.0)

    # Focal modulation: alpha * (1 - pt)^2 * ce, with the square as a plain multiply.
    pt = jnp.exp(-ce)
    d = 1.0 - pt
    focal = ALPHA * d * d * ce                                # (TILE_N, 1)

    # Per-tile partial sum broadcast into a lane-dense (1, 8, 128) block (unmasked store).
    partial_ref[...] = jnp.broadcast_to(jnp.sum(focal), partial_ref.shape)


def _round_up(x, m):
    return ((x + m - 1) // m) * m


def _row_align(itemsize):
    # Sublane packing: f32 -> 8 rows, bf16 -> 16, int8/fp8 -> 32.
    return max(8, 32 // max(1, itemsize))


def _vmem_budget():
    # Generation-aware VMEM budgeting: v5e/v6e have 128 MiB physical VMEM, v7x has 64 MiB.
    try:
        cap = int(pltpu.get_tpu_info().vmem_capacity_bytes)
    except Exception:
        cap = 64 * 1024 * 1024                                 # conservative v7x-like fallback
    if cap >= 100 * 1024 * 1024:                               # v5e / v6e
        return 40 * 1024 * 1024, 64 * 1024 * 1024              # (working-set target, vmem_limit)
    return 26 * 1024 * 1024, 48 * 1024 * 1024                  # v7x


def _choose_tile_n(n, c, itemsize, row_align):
    work_budget, vmem_limit = _vmem_budget()
    # Per-row working set ~ 2x double-buffered native input + ~4 full-width f32 temporaries.
    per_row = c * (2 * itemsize + 4 * 4)
    tile = max(row_align, (work_budget // max(1, per_row)) // row_align * row_align)
    # Keep >= 2 grid steps so the "parallel" axis can shard across v7x's two TensorCores.
    tile = min(tile, max(row_align, _round_up(pl.cdiv(n, 2), row_align)))
    tile = min(tile, _round_up(n, row_align))
    return tile, vmem_limit


def focal_loss(logits, targets, tile_n=None):
    """logits: (N, C) float32/bfloat16; targets: (N,) int class indices (-100 = ignore).

    Matches the PyTorch module: F.cross_entropy(reduction='none', ignore_index=-100), focal
    modulation, then .mean().  NOTE: the mean intentionally divides by ALL N rows, including
    ignore_index rows (that is what `focal_loss.mean()` does in the reference module) — do
    not "fix" the divisor to the number of valid rows.  Out-of-range non-negative targets
    silently yield ce = logsumexp (no error), unlike PyTorch which would raise.
    """
    N, C = logits.shape
    itemsize = jnp.dtype(logits.dtype).itemsize
    row_align = _row_align(itemsize)

    if tile_n is None:
        tile_n, vmem_limit = _choose_tile_n(N, C, itemsize, row_align)
    else:
        _, vmem_limit = _vmem_budget()
        tile_n = max(row_align, (tile_n // row_align) * row_align)

    num_tiles = pl.cdiv(N, tile_n)
    padded_n = num_tiles * tile_n

    # Only the tiny 1-D targets array is padded; logits are read ragged and masked in-kernel.
    targets = targets.astype(jnp.int32)
    if padded_n != N:
        targets = jnp.pad(targets, (0, padded_n - N), constant_values=IGNORE_INDEX)
    targets2d = targets.reshape(padded_n, 1)

    # TODO(synk): for very large C (tens of thousands of classes) add a second grid axis over
    # C with online-softmax scratch (running max / exp-sum / target-logit) so tile_n can stay
    # >= row_align within v7x's 64 MiB VMEM.
    kernel = functools.partial(focal_loss_kernel, n_rows=N, tile_n=tile_n)
    partials = pl.pallas_call(
        kernel,
        out_shape=jax.ShapeDtypeStruct((num_tiles, 8, 128), jnp.float32),
        grid=(num_tiles,),
        in_specs=[
            pl.BlockSpec((tile_n, C), lambda i: (i, 0)),
            pl.BlockSpec((tile_n, 1), lambda i: (i, 0)),
        ],
        out_specs=pl.BlockSpec((1, 8, 128), lambda i: (i, 0, 0)),
        compiler_params=pltpu.CompilerParams(
            dimension_semantics=("parallel",),
            vmem_limit_bytes=vmem_limit,
        ),
    )(logits, targets2d)

    # reduction='mean' over ALL N rows (including ignored ones), matching the PyTorch module.
    return jnp.sum(partials[:, 0, 0]) * jnp.float32(1.0 / N)


def focal_loss_ref(logits, targets):
    """Pure-JAX reference mirroring the PyTorch FocalLoss forward."""
    logp = jax.nn.log_softmax(logits.astype(jnp.float32), axis=-1)
    valid = targets != IGNORE_INDEX
    safe_tgt = jnp.where(valid, targets, 0)
    ce = -jnp.take_along_axis(logp, safe_tgt[:, None], axis=-1)[:, 0]
    ce = jnp.where(valid, ce, 0.0)
    pt = jnp.exp(-ce)
    focal = ALPHA * (1.0 - pt) ** GAMMA * ce
    return focal.mean()


if __name__ == "__main__":
    key = jax.random.PRNGKey(0)
    k1, k2, k3, k4 = jax.random.split(key, 4)

    # Case 1: small single-tile problem with an ignored row (auto tile chooser).
    N1, C1 = 8, 32
    logits1 = jax.random.normal(k1, (N1, C1), dtype=jnp.float32)
    targets1 = jax.random.randint(k2, (N1,), 0, C1, dtype=jnp.int32)
    targets1 = targets1.at[3].set(IGNORE_INDEX)
    out1 = focal_loss(logits1, targets1)
    jax.block_until_ready(out1)
    ref1 = focal_loss_ref(logits1, targets1)
    assert jnp.allclose(out1, ref1, atol=1e-5, rtol=1e-5), (out1, ref1)

    # Case 2: multi-tile grid with a ragged last tile (no logits padding) + ignored rows.
    N2, C2 = 200, 32
    logits2 = jax.random.normal(k3, (N2, C2), dtype=jnp.float32)
    targets2 = jax.random.randint(k4, (N2,), 0, C2, dtype=jnp.int32)
    targets2 = targets2.at[7].set(IGNORE_INDEX)
    targets2 = targets2.at[150].set(IGNORE_INDEX)
    out2 = focal_loss(logits2, targets2, tile_n=64)
    jax.block_until_ready(out2)
    ref2 = focal_loss_ref(logits2, targets2)
    assert jnp.allclose(out2, ref2, atol=1e-5, rtol=1e-5), (out2, ref2)

    # Case 3: bf16 logits fed natively (halves HBM traffic); kernel upcasts internally.
    logits3 = logits2.astype(jnp.bfloat16)
    out3 = focal_loss(logits3, targets2, tile_n=64)
    jax.block_until_ready(out3)
    ref3 = focal_loss_ref(logits3, targets2)
    assert jnp.allclose(out3, ref3, atol=1e-3, rtol=1e-3), (out3, ref3)

    # Case 4: auto tile chooser on a non-divisible N (exercises the >=2-tile cap + row mask).
    out4 = focal_loss(logits2, targets2)
    jax.block_until_ready(out4)
    assert jnp.allclose(out4, ref2, atol=1e-5, rtol=1e-5), (out4, ref2)

    print("KERNEL_OK")
</pallas_src>

<mosaic_0001>
module attributes {stable_mosaic.version = 11 : i64} {
  func.func @focal_loss_kernel(%arg0: i32, %arg1: memref<8x32xf32, #tpu.memory_space<vmem>>, %arg2: memref<8x1xi32, #tpu.memory_space<vmem>>, %arg3: memref<1x8x128xf32, #tpu.memory_space<vmem>>) attributes {dimension_semantics = [#tpu.dimension_semantics<parallel>], iteration_bounds = array<i64: 1>, scalar_prefetch = 0 : i64, scratch_operands = 0 : i64, tpu.core_type = #tpu.core_type<tc>, window_params = [{transform_indices = @transform_0, window_bounds = array<i64: 8, 32>}, {transform_indices = @transform_1, window_bounds = array<i64: 8, 1>}, {transform_indices = @transform_2, window_bounds = array<i64: 1, 8, 128>}]} {
    %c0 = arith.constant 0 : index
    %c0_0 = arith.constant 0 : index
    %0 = vector.load %arg1[%c0, %c0_0] : memref<8x32xf32, #tpu.memory_space<vmem>>, vector<8x32xf32>
    %c0_1 = arith.constant 0 : index
    %c0_2 = arith.constant 0 : index
    %1 = vector.load %arg2[%c0_1, %c0_2] : memref<8x1xi32, #tpu.memory_space<vmem>>, vector<8x1xi32>
    %cst = arith.constant dense<0xFF800000> : vector<8xf32>
    %2 = vector.multi_reduction <maximumf>, %0, %cst [1] : vector<8x32xf32> to vector<8xf32>
    %3 = vector.shape_cast %2 : vector<8xf32> to vector<8x1xf32>
    %4 = vector.broadcast %3 : vector<8x1xf32> to vector<8x32xf32>
    %5 = arith.subf %0, %4 : vector<8x32xf32>
    %6 = math.exp %5 : vector<8x32xf32>
    %cst_3 = arith.constant dense<0.000000e+00> : vector<8xf32>
    %7 = vector.multi_reduction <add>, %6, %cst_3 [1] : vector<8x32xf32> to vector<8xf32>
    %8 = vector.shape_cast %7 : vector<8xf32> to vector<8x1xf32>
    %9 = math.log %8 : vector<8x1xf32>
    %10 = arith.addf %9, %3 : vector<8x1xf32>
    %11 = tpu.iota {dimensions = array<i32: 1>} : vector<1x32xi32>
    %12 = vector.broadcast %11 : vector<1x32xi32> to vector<8x32xi32>
    %13 = vector.broadcast %1 : vector<8x1xi32> to vector<8x32xi32>
    %14 = arith.cmpi eq, %12, %13 : vector<8x32xi32>
    %cst_4 = arith.constant 0.000000e+00 : f32
    %15 = vector.broadcast %cst_4 : f32 to vector<8x32xf32>
    %16 = arith.select %14, %0, %15 : vector<8x32xi1>, vector<8x32xf32>
    %cst_5 = arith.constant dense<0.000000e+00> : vector<8xf32>
    %17 = vector.multi_reduction <add>, %16, %cst_5 [1] : vector<8x32xf32> to vector<8xf32>
    %18 = vector.shape_cast %17 : vector<8xf32> to vector<8x1xf32>
    %c8_i32 = arith.constant 8 : i32
    %19 = arith.muli %arg0, %c8_i32 : i32
    %20 = tpu.iota {dimensions = array<i32: 0>} : vector<8x1xi32>
    %21 = vector.broadcast %19 : i32 to vector<8x1xi32>
    %22 = arith.addi %21, %20 : vector<8x1xi32>
    %c8_i32_6 = arith.constant 8 : i32
    %23 = vector.broadcast %c8_i32_6 : i32 to vector<8x1xi32>
    %24 = arith.cmpi slt, %22, %23 : vector<8x1xi32>
    %c-100_i32 = arith.constant -100 : i32
    %25 = vector.broadcast %c-100_i32 : i32 to vector<8x1xi32>
    %26 = arith.cmpi ne, %1, %25 : vector<8x1xi32>
    %27 = arith.andi %24, %26 : vector<8x1xi1>
    %28 = arith.subf %10, %18 : vector<8x1xf32>
    %cst_7 = arith.constant 0.000000e+00 : f32
    %29 = vector.broadcast %cst_7 : f32 to vector<8x1xf32>
    %30 = arith.select %27, %28, %29 : vector<8x1xi1>, vector<8x1xf32>
    %cst_8 = arith.constant 0.000000e+00 : f32
    %31 = vector.broadcast %cst_8 : f32 to vector<8x1xf32>
    %32 = arith.subf %31, %30 : vector<8x1xf32>
    %33 = math.exp %32 : vector<8x1xf32>
    %cst_9 = arith.constant 1.000000e+00 : f32
    %34 = vector.broadcast %cst_9 : f32 to vector<8x1xf32>
    %35 = arith.subf %34, %33 : vector<8x1xf32>
    %cst_10 = arith.constant 1.000000e+00 : f32
    %36 = vector.broadcast %cst_10 : f32 to vector<8x1xf32>
    %37 = arith.mulf %36, %35 : vector<8x1xf32>
    %38 = arith.mulf %37, %35 : vector<8x1xf32>
    %39 = arith.mulf %38, %30 : vector<8x1xf32>
    %40 = vector.shape_cast %39 : vector<8x1xf32> to vector<1x8x1xf32>
    %cst_11 = arith.constant dense<0.000000e+00> : vector<1xf32>
    %41 = vector.multi_reduction <add>, %40, %cst_11 [1, 2] : vector<1x8x1xf32> to vector<1xf32>
    %42 = vector.shape_cast %41 : vector<1xf32> to vector<1x1x1xf32>
    %43 = vector.extract %42[0, 0, 0] : f32 from vector<1x1x1xf32>
    %44 = vector.broadcast %43 : f32 to vector<1x8x128xf32>
    %c0_12 = arith.constant 0 : index
    %c0_13 = arith.constant 0 : index
    %c0_14 = arith.constant 0 : index
    %45 = vector.load %arg3[%c0_12, %c0_13, %c0_14] : memref<1x8x128xf32, #tpu.memory_space<vmem>>, vector<1x8x128xf32>
    tpu.vector_store %arg3[%c0_12, %c0_13, %c0_14], %44 {strides = array<i32>} : memref<1x8x128xf32, #tpu.memory_space<vmem>>, vector<1x8x128xf32>,
    return
  }
  func.func @transform_0(%arg0: i32) -> (i32, i32) {
    %c0_i32 = arith.constant 0 : i32
    %c0_i32_0 = arith.constant 0 : i32
    return %arg0, %c0_i32 : i32, i32
  }
  func.func @transform_1(%arg0: i32) -> (i32, i32) {
    %c0_i32 = arith.constant 0 : i32
    %c0_i32_0 = arith.constant 0 : i32
    return %arg0, %c0_i32 : i32, i32
  }
  func.func @transform_2(%arg0: i32) -> (i32, i32, i32) {
    %c0_i32 = arith.constant 0 : i32
    %c0_i32_0 = arith.constant 0 : i32
    %c0_i32_1 = arith.constant 0 : i32
    return %arg0, %c0_i32, %c0_i32_0 : i32, i32, i32
  }
}

</mosaic_0001>

<llo_original>
// kernel: tpu_custom_call.1
$region0: #{tpu_custom_call.1}
  #allocation0 [shape = 'u32[]', space=smem, size = 0x4, offset = 0x4, fixed_abs, tag = 'smem constant byte address 0x4 - core index']
  #allocation1 [shape = 'u32[144,128]{1,0:T(1,128)}', space=vmem, size = 0x12000, scoped, tag = 'internal scratch']
  %s0 = inlined_call_operand.vmem [shape: f32[8,32], index: 0, kind: input, shape index: {}]
  %s1 = inlined_call_operand.vmem [shape: s32[8,1], index: 1, kind: input, shape index: {}]
  %s2 = inlined_call_operand.hbm [shape: f32[1,8,128], index: 2, kind: output, shape index: {}]
  %s3 = sld [smem:[#allocation0]]
  $region18: #{tpu_custom_call.1} parent=0
    _
  %s5 = ssub.s32 1, %s3
  %s6 = scalar_select 0, %s5, %s3
  $region1: #{tpu_custom_call.1} parent=0
    #allocation2 [shape = 'u8[4096]{0}', space=vmem, size = 0x1000, scoped, tag = 'output window, operand 0, single buffered']
    #allocation3 [shape = 's32[1]{0}', space=sflag, size = 0x4, scoped, tag = 'scoped memory for tpu_custom_call.1']
    %7 = vsyncpa [#allocation3], 0
    // Predicated region
    $region2: #{tpu_custom_call.1} parent=1 // pred_check
      _
    $region3: #{tpu_custom_call.1} parent=1 // pred_check_branch
      %9 = sbr.rel (0) target = $region5
    $region4: #{tpu_custom_call.1} parent=1 // pred_region
      _
    $region5: #{tpu_custom_call.1} parent=1 // pred_fallthru
      _
    // Predicated region
    $region6: #{tpu_custom_call.1} parent=1 // pred_check
      _
    $region7: #{tpu_custom_call.1} parent=1 // pred_check_branch
      %11 = sbr.rel (0) target = $region9
    $region8: #{tpu_custom_call.1} parent=1 // pred_region
      _
    $region9: #{tpu_custom_call.1} parent=1 // pred_fallthru
      _
    %v12 = vld [vmem:[%s0] sm:$0xff]
    %v13 = vld [vmem:[%s1] sm:$0xff]
    %vm14 = vcmask 261120
    %v15 = vsel %vm14, %v12, -inf
    %16 = vmax.xlane.f32.xlu0 %v15
    %v17 = vpop.xlane.xlu0 %16
    %v18 = vsub.f32 %v12, %v17
    %v19 = vmul.f32 %v18, 1.442695
    %v20 = vpow.pop %v19
    %v21 = vsel %vm14, %v20, 0.0
    %22 = vadd.xlane.f32.xlu0 %v21
    %v23 = vpop.xlane.xlu0 %22
    %v24 = vlog2.pop %v23
    %v25 = vmul.f32 %v24, 0.6931472
    %v26 = vadd.f32 %v25, %v17
    %v27 = vlaneseq
    %v28 = vand.u32 %v27, 127
    %29 = vset.pattern.permute.xlu0 0
    %30 = vperm.xlu0 %29, %v13
    %v31 = vpop.permute.xlu0 %30
    %vm32 = vcmp.eq.s32.totalorder %v28, %v31
    %v33 = vsel %vm32, %v12, 0.0
    %v34 = vsel %vm14, %v33, 0.0
    %35 = vadd.xlane.f32.xlu0 %v34
    %v36 = vpop.xlane.xlu0 %35
    %s37 = smul.u32 0, 8
    %v38 = vlaneseq
    %v39 = vshrl.u32 %v38, 7
    %v40 = vstv %s37
    %v41 = vadd.s32 %v40, %v39
    %vm42 = vcmp.lt.s32.totalorder %v41, 8
    %vm43 = vcmp.ne.s32.totalorder %v13, 4294967196
    %vm44 = vmand %vm42, %vm43
    %v45 = vsub.f32 %v26, %v36
    %v46 = vsel %vm44, %v45, 0.0
    %v47 = vsub.f32 0.0, %v46
    %v48 = vmul.f32 %v47, 1.442695
    %v49 = vpow.pop %v48
    %v50 = vsub.f32 1.0, %v49
    %v51 = vmul.f32 %v50, %v50
    %v52 = vmul.f32 %v51, %v46
    %vm53 = vcmask 7168
    %v54 = vsel %vm53, %v52, 0.0
    %55 = vadd.xlane.f32.xlu0 %v54
    %v56 = vpop.xlane.xlu0 %55
    %v57 = vrot.slane %v56, 4
    %v58 = vadd.f32 %v56, %v57
    %v59 = vrot.slane %v58, 2
    %v60 = vadd.f32 %v58, %v59
    %v61 = vrot.slane %v60, 1
    %v62 = vadd.f32 %v60, %v61
    %s63 = vtos %v62
    %v64 = vstv %s63
    %65 = vst [vmem:[#allocation2] sm:$0xff] %v64
    // Predicated region
    $region10: #{tpu_custom_call.1} parent=1 // pred_check
      _
    $region11: #{tpu_custom_call.1} parent=1 // pred_check_branch
      %67 = sbr.rel (0) target = $region13
    $region12: #{tpu_custom_call.1} parent=1 // pred_region
      %s69 = ssub.s32 128, 128
      %70 = vsyncadd [#allocation3], %s69
      %s72 = sshll.u32 [#allocation2], 4
      %s73 = int_to_ptr.vmem [resolvable:$true] %s72
      %75 = dma.vmem_to_hbm [thread:$0]  %s73, 128, %s2, [#allocation3]
    $region13: #{tpu_custom_call.1} parent=1 // pred_fallthru
      _
    // Predicated region
    $region14: #{tpu_custom_call.1} parent=1 // pred_check
      _
    $region15: #{tpu_custom_call.1} parent=1 // pred_check_branch
      %77 = sbr.rel (0) target = $region17
    $region16: #{tpu_custom_call.1} parent=1 // pred_region
      %78 = dma.done [#allocation3], 128
    $region17: #{tpu_custom_call.1} parent=1 // pred_fallthru
      _
    %79 = vsyncpa [#allocation3], 1

</llo_original>
